<compile_context>
chip_gen: v7x
topology: tpu7x:2x2x1
jax: 0.10.0
libtpu: 0.0.40
codegen_flags: <defaults>
</compile_context>

<pallas_src>
import math
import jax
import jax.numpy as jnp
from jax.experimental import pallas as pl
from jax.experimental.pallas import tpu as pltpu

_LANE = 128          # TPU vreg lane width
_SUBLANE = 8         # TPU vreg sublane width
_MAX_TILE_B = 512    # batch tile upper bound (fits 64 MiB VMEM on v7x with headroom)


def _gelu_tanh(x):
    c = math.sqrt(2.0 / math.pi)
    return 0.5 * x * (1.0 + jnp.tanh(c * (x + 0.044715 * x * x * x)))


def _round_up(n, m):
    return ((n + m - 1) // m) * m


def _classifier_kernel(x_ref, w_ref, b_ref, o_ref):
    # GELU (tanh approx) in f32 on the VPU/EUP, then a lane-dense matmul on the MXU.
    h = _gelu_tanh(x_ref[...].astype(jnp.float32))
    y = jnp.dot(h.astype(w_ref.dtype), w_ref[...],
                preferred_element_type=jnp.float32)
    o_ref[...] = (y + b_ref[...].astype(jnp.float32)).astype(o_ref.dtype)


def multi_classifier_svhn(x, w, b, *, tile_b=_MAX_TILE_B, use_bf16_matmul=False):
    """x: (B, Z) f32; w: (Z, 10); b: (10,) -> (B, 10) = gelu_tanh(x) @ w + b."""
    B, Z = x.shape
    O = w.shape[1]

    # ---- lane-dense padding of the output/weight columns (10 -> 128) ----
    O_pad = _round_up(max(O, _LANE), _LANE)
    w_p = jnp.zeros((Z, O_pad), dtype=w.dtype).at[:, :O].set(w)
    b_p = jnp.zeros((1, O_pad), dtype=jnp.float32).at[0, :O].set(
        b.astype(jnp.float32))
    if use_bf16_matmul:
        # bf16 MXU operands, f32 accumulation (preferred_element_type) in-kernel.
        w_p = w_p.astype(jnp.bfloat16)

    # ---- batch tiling (sublane-aligned, VMEM-budgeted for v7x) ----
    TB = min(tile_b, _round_up(B, _SUBLANE))
    TB = _round_up(TB, _SUBLANE)
    B_pad = _round_up(B, TB)
    if B_pad != B:
        x_p = jnp.zeros((B_pad, Z), dtype=x.dtype).at[:B].set(x)
    else:
        x_p = x
    grid = (B_pad // TB,)

    cost = pl.CostEstimate(
        flops=2 * B_pad * Z * O_pad + 10 * B_pad * Z,
        transcendentals=B_pad * Z,
        bytes_accessed=(x_p.size * x_p.dtype.itemsize
                        + w_p.size * w_p.dtype.itemsize
                        + b_p.size * b_p.dtype.itemsize
                        + B_pad * O_pad * x.dtype.itemsize),
    )

    out = pl.pallas_call(
        _classifier_kernel,
        out_shape=jax.ShapeDtypeStruct((B_pad, O_pad), x.dtype),
        grid_spec=pl.GridSpec(
            grid=grid,
            in_specs=[
                pl.BlockSpec((TB, Z), lambda i: (i, 0)),       # x: streamed per tile
                pl.BlockSpec((Z, O_pad), lambda i: (0, 0)),    # w: VMEM-resident
                pl.BlockSpec((1, O_pad), lambda i: (0, 0)),    # b: VMEM-resident
            ],
            out_specs=pl.BlockSpec((TB, O_pad), lambda i: (i, 0)),
        ),
        compiler_params=pltpu.CompilerParams(
            dimension_semantics=("parallel",),   # batch tiles shard across TCs (v7x)
            vmem_limit_bytes=64 << 20,
        ),
        cost_estimate=cost,
    )(x_p, w_p, b_p)

    # Strip batch padding and the zero-padded output columns.
    return out[:B, :O]


def _reference(x, w, b):
    return _gelu_tanh(x) @ w + b


if __name__ == "__main__":
    key = jax.random.PRNGKey(0)
    B, Z, O = 8, 32, 10  # batch=8, z_dim=32, num_classes=10 (matches nn.Linear(z_dim, 10))

    kx, kw, kb = jax.random.split(key, 3)
    x = jax.random.normal(kx, (B, Z), dtype=jnp.float32)

    # Deterministic Linear(z_dim, 10) init (PyTorch-style uniform bounds).
    bound = 1.0 / math.sqrt(Z)
    w = jax.random.uniform(kw, (Z, O), minval=-bound, maxval=bound, dtype=jnp.float32)
    b = jax.random.uniform(kb, (O,), minval=-bound, maxval=bound, dtype=jnp.float32)

    out = multi_classifier_svhn(x, w, b)
    out = jax.block_until_ready(out)

    ref = _reference(x, w, b)
    assert out.shape == (B, O)
    assert jnp.allclose(out, ref, atol=1e-5, rtol=1e-5), "mismatch vs reference"
    print("KERNEL_OK")
</pallas_src>

<mosaic_0001>
module attributes {stable_mosaic.version = 11 : i64} {
  func.func @_classifier_kernel(%arg0: i32, %arg1: memref<8x32xf32, #tpu.memory_space<vmem>>, %arg2: memref<32x128xf32, #tpu.memory_space<vmem>>, %arg3: memref<1x128xf32, #tpu.memory_space<vmem>>, %arg4: memref<8x128xf32, #tpu.memory_space<vmem>>) attributes {dimension_semantics = [#tpu.dimension_semantics<parallel>], iteration_bounds = array<i64: 1>, scalar_prefetch = 0 : i64, scratch_operands = 0 : i64, tpu.core_type = #tpu.core_type<tc>, window_params = [{transform_indices = @transform_0, window_bounds = array<i64: 8, 32>}, {pipeline_mode = #tpu.pipeline_mode<synchronous>, transform_indices = @transform_1, window_bounds = array<i64: 32, 128>}, {pipeline_mode = #tpu.pipeline_mode<synchronous>, transform_indices = @transform_2, window_bounds = array<i64: 1, 128>}, {transform_indices = @transform_3, window_bounds = array<i64: 8, 128>}]} {
    %c0 = arith.constant 0 : index
    %c0_0 = arith.constant 0 : index
    %0 = vector.load %arg1[%c0, %c0_0] : memref<8x32xf32, #tpu.memory_space<vmem>>, vector<8x32xf32>
    %cst = arith.constant 5.000000e-01 : f32
    %1 = vector.broadcast %cst : f32 to vector<8x32xf32>
    %2 = arith.mulf %1, %0 : vector<8x32xf32>
    %cst_1 = arith.constant 4.471500e-02 : f32
    %3 = vector.broadcast %cst_1 : f32 to vector<8x32xf32>
    %4 = arith.mulf %3, %0 : vector<8x32xf32>
    %5 = arith.mulf %4, %0 : vector<8x32xf32>
    %6 = arith.mulf %5, %0 : vector<8x32xf32>
    %7 = arith.addf %0, %6 : vector<8x32xf32>
    %cst_2 = arith.constant 0.797884583 : f32
    %8 = vector.broadcast %cst_2 : f32 to vector<8x32xf32>
    %9 = arith.mulf %8, %7 : vector<8x32xf32>
    %10 = math.tanh %9 : vector<8x32xf32>
    %cst_3 = arith.constant 1.000000e+00 : f32
    %11 = vector.broadcast %cst_3 : f32 to vector<8x32xf32>
    %12 = arith.addf %11, %10 : vector<8x32xf32>
    %13 = arith.mulf %2, %12 : vector<8x32xf32>
    %c0_4 = arith.constant 0 : index
    %c0_5 = arith.constant 0 : index
    %14 = vector.load %arg2[%c0_4, %c0_5] : memref<32x128xf32, #tpu.memory_space<vmem>>, vector<32x128xf32>
    %cst_6 = arith.constant dense<0.000000e+00> : vector<8x128xf32>
    %15 = tpu.matmul %13, %14, %cst_6 {dimension_numbers = #tpu.dot_dimension_numbers<[1], [0], [0], [1], [0, 0, 1, 1], [], []>} : vector<8x32xf32>, vector<32x128xf32>, vector<8x128xf32> -> vector<8x128xf32>
    %c0_7 = arith.constant 0 : index
    %c0_8 = arith.constant 0 : index
    %16 = vector.load %arg3[%c0_7, %c0_8] : memref<1x128xf32, #tpu.memory_space<vmem>>, vector<1x128xf32>
    %17 = vector.broadcast %16 : vector<1x128xf32> to vector<8x128xf32>
    %18 = arith.addf %15, %17 : vector<8x128xf32>
    %c0_9 = arith.constant 0 : index
    %c0_10 = arith.constant 0 : index
    %19 = vector.load %arg4[%c0_9, %c0_10] : memref<8x128xf32, #tpu.memory_space<vmem>>, vector<8x128xf32>
    tpu.vector_store %arg4[%c0_9, %c0_10], %18 {strides = array<i32>} : memref<8x128xf32, #tpu.memory_space<vmem>>, vector<8x128xf32>,
    return
  }
  func.func @transform_0(%arg0: i32) -> (i32, i32) {
    %c0_i32 = arith.constant 0 : i32
    %c0_i32_0 = arith.constant 0 : i32
    return %arg0, %c0_i32 : i32, i32
  }
  func.func @transform_1(%arg0: i32) -> (i32, i32) {
    %c0_i32 = arith.constant 0 : i32
    %c0_i32_0 = arith.constant 0 : i32
    %c0_i32_1 = arith.constant 0 : i32
    return %c0_i32, %c0_i32_0 : i32, i32
  }
  func.func @transform_2(%arg0: i32) -> (i32, i32) {
    %c0_i32 = arith.constant 0 : i32
    %c0_i32_0 = arith.constant 0 : i32
    %c0_i32_1 = arith.constant 0 : i32
    return %c0_i32, %c0_i32_0 : i32, i32
  }
  func.func @transform_3(%arg0: i32) -> (i32, i32) {
    %c0_i32 = arith.constant 0 : i32
    %c0_i32_0 = arith.constant 0 : i32
    return %arg0, %c0_i32 : i32, i32
  }
}

</mosaic_0001>

<llo_original>
// kernel: tpu_custom_call.1
$region0: #{tpu_custom_call.1}
  #allocation0 [shape = 'u32[]', space=smem, size = 0x4, offset = 0x4, fixed_abs, tag = 'smem constant byte address 0x4 - core index']
  #allocation1 [shape = 'u32[144,128]{1,0:T(1,128)}', space=vmem, size = 0x12000, scoped, tag = 'internal scratch']
  %s0 = inlined_call_operand.hbm [shape: f32[8,32], index: 0, kind: input, shape index: {}]
  %s1 = inlined_call_operand.hbm [shape: f32[32,128], index: 1, kind: input, shape index: {}]
  %s2 = inlined_call_operand.hbm [shape: f32[1,128], index: 2, kind: input, shape index: {}]
  %s3 = inlined_call_operand.hbm [shape: f32[8,128], index: 3, kind: output, shape index: {}]
  %s4 = sld [smem:[#allocation0]]
  $region34: #{tpu_custom_call.1} parent=0
    _
  %s6 = ssub.s32 1, %s4
  %s7 = scalar_select 0, %s6, %s4
  $region1: #{tpu_custom_call.1} parent=0
    #allocation2 [shape = 'u8[4096]{0}', space=vmem, size = 0x1000, scoped, tag = 'input window, operand 0, single buffered']
    #allocation3 [shape = 's32[1]{0}', space=sflag, size = 0x4, scoped, tag = 'scoped memory for tpu_custom_call.1']
    #allocation4 [shape = 's32[1]{0}', space=sflag, size = 0x4, scoped, tag = 'scoped memory for tpu_custom_call.1']
    #allocation5 [shape = 'u8[16384]{0}', space=vmem, size = 0x4000, scoped, tag = 'input window, operand 1, single buffered']
    #allocation6 [shape = 's32[1]{0}', space=sflag, size = 0x4, scoped, tag = 'scoped memory for tpu_custom_call.1']
    #allocation7 [shape = 'u8[512]{0}', space=vmem, size = 0x400, scoped, tag = 'input window, operand 2, single buffered']
    #allocation8 [shape = 'u8[4096]{0}', space=vmem, size = 0x1000, scoped, tag = 'output window, operand 0, single buffered']
    %8 = vsyncpa [#allocation3], 0
    %9 = vsyncpa [#allocation6], 0
    %10 = vsyncpa [#allocation4], 0
    // Predicated region
    $region2: #{tpu_custom_call.1} parent=1 // pred_check
      _
    $region3: #{tpu_custom_call.1} parent=1 // pred_check_branch
      %12 = sbr.rel (0) target = $region5
    $region4: #{tpu_custom_call.1} parent=1 // pred_region
      %s14 = ssub.s32 128, 128
      %15 = vsyncadd [#allocation3], %s14
      %s17 = sshll.u32 [#allocation2], 4
      %s18 = int_to_ptr.vmem [resolvable:$true] %s17
      %20 = dma.hbm_to_vmem [thread:$0]  %s0, 128, %s18, [#allocation3]
    $region5: #{tpu_custom_call.1} parent=1 // pred_fallthru
      _
    // Predicated region
    $region6: #{tpu_custom_call.1} parent=1 // pred_check
      _
    $region7: #{tpu_custom_call.1} parent=1 // pred_check_branch
      %22 = sbr.rel (0) target = $region9
    $region8: #{tpu_custom_call.1} parent=1 // pred_region
      %s24 = ssub.s32 512, 512
      %25 = vsyncadd [#allocation6], %s24
      %s26 = sshll.u32 [#allocation5], 4
      %s27 = int_to_ptr.vmem [resolvable:$true] %s26
      %32 = dma.hbm_to_vmem [thread:$0]  %s1, 512, %s27, [#allocation6], 128, 128, 8
    $region9: #{tpu_custom_call.1} parent=1 // pred_fallthru
      _
    // Predicated region
    $region10: #{tpu_custom_call.1} parent=1 // pred_check
      _
    $region11: #{tpu_custom_call.1} parent=1 // pred_check_branch
      %34 = sbr.rel (0) target = $region13
    $region12: #{tpu_custom_call.1} parent=1 // pred_region
      %s36 = ssub.s32 16, 16
      %37 = vsyncadd [#allocation6], %s36
      %s39 = sshll.u32 [#allocation7], 4
      %s40 = int_to_ptr.vmem [resolvable:$true] %s39
      %42 = dma.hbm_to_vmem [thread:$0]  %s2, 16, %s40, [#allocation6]
    $region13: #{tpu_custom_call.1} parent=1 // pred_fallthru
      _
    // Predicated region
    $region14: #{tpu_custom_call.1} parent=1 // pred_check
      _
    $region15: #{tpu_custom_call.1} parent=1 // pred_check_branch
      %44 = sbr.rel (0) target = $region17
    $region16: #{tpu_custom_call.1} parent=1 // pred_region
      %45 = dma.done [#allocation3], 128
    $region17: #{tpu_custom_call.1} parent=1 // pred_fallthru
      _
    // Predicated region
    $region18: #{tpu_custom_call.1} parent=1 // pred_check
      _
    $region19: #{tpu_custom_call.1} parent=1 // pred_check_branch
      %47 = sbr.rel (0) target = $region21
    $region20: #{tpu_custom_call.1} parent=1 // pred_region
      %48 = dma.done [#allocation6], 512
    $region21: #{tpu_custom_call.1} parent=1 // pred_fallthru
      _
    // Predicated region
    $region22: #{tpu_custom_call.1} parent=1 // pred_check
      _
    $region23: #{tpu_custom_call.1} parent=1 // pred_check_branch
      %50 = sbr.rel (0) target = $region25
    $region24: #{tpu_custom_call.1} parent=1 // pred_region
      %51 = dma.done [#allocation6], 16
    $region25: #{tpu_custom_call.1} parent=1 // pred_fallthru
      _
    %v52 = vld [vmem:[#allocation2] sm:$0xff]
    %v53 = vmul.f32 %v52, 0.5
    %v54 = vmul.f32 %v52, 0.044715
    %v55 = vmul.f32 %v54, %v52
    %v56 = vmul.f32 %v55, %v52
    %v57 = vadd.f32 %v52, %v56
    %v58 = vmul.f32 %v57, 0.7978846
    %v59 = vtanh.pop %v58
    %v60 = vadd.f32 %v59, 1.0
    %v61 = vmul.f32 %v53, %v60
    %v62 = vld [vmem:[#allocation5] sm:$0xff]
    %v63 = vld [vmem:[#allocation5 + $0x8] sm:$0xff]
    %v64 = vld [vmem:[#allocation5 + $0x10] sm:$0xff]
    %v65 = vld [vmem:[#allocation5 + $0x18] sm:$0xff]
    %v66 = vld [vmem:[#allocation7] sm:$0x1]
    %v68 = vlaneseq
    %v69 = vshrl.u32 %v68, 7
    %v70 = vsub.s32 0, %v69
    %v71 = vrot.slane %v66, %v70
    %vm73 = vcmask 261120
    %v75 = vsel %vm73, %v61, 0
    %77 = vmatprep.subr.mxu0 0.0
    %78 = vmatpush1.msra.mxu0 %v62
    %79 = vmatprep.subr.mxu0 0.0
    %80 = vmatpush1.msra.mxu0 %v63
    %81 = vmatprep.subr.mxu0 0.0
    %82 = vmatpush1.msra.mxu0 %v64
    %83 = vmatprep.subr.mxu0 0.0
    %84 = vmatpush1.msra.mxu0 %v65
    %85 = vmatprep.subr.mxu0 0.0
    %86 = vmatpush1.msra.mxu0 0.0
    %87 = vmatprep.subr.mxu0 0.0
    %88 = vmatpush1.msra.mxu0 0.0
    %89 = vmatprep.subr.mxu0 0.0
    %90 = vmatpush1.msra.mxu0 0.0
    %91 = vmatprep.subr.mxu0 0.0
    %92 = vmatpush1.msra.mxu0 0.0
    %93 = vmatprep.subr.mxu0 0.0
    %94 = vmatpush1.msra.mxu0 0.0
    %95 = vmatprep.subr.mxu0 0.0
    %96 = vmatpush1.msra.mxu0 0.0
    %97 = vmatprep.subr.mxu0 0.0
    %98 = vmatpush1.msra.mxu0 0.0
    %99 = vmatprep.subr.mxu0 0.0
    %100 = vmatpush1.msra.mxu0 0.0
    %101 = vmatprep.subr.mxu0 0.0
    %102 = vmatpush1.msra.mxu0 0.0
    %103 = vmatprep.subr.mxu0 0.0
    %104 = vmatpush1.msra.mxu0 0.0
    %105 = vmatprep.subr.mxu0 0.0
    %106 = vmatpush1.msra.mxu0 0.0
    %107 = vmatprep.subr.mxu0 0.0
    %108 = vmatpush1.msra.mxu0 0.0
    %109 = vmatprep.subr.mxu0 0.0
    %110 = vmatpush1.msra.mxu0 0.0
    %111 = vmatprep.subr.mxu0 0.0
    %112 = vmatpush1.msra.mxu0 0.0
    %113 = vmatprep.subr.mxu0 0.0
    %114 = vmatpush1.msra.mxu0 0.0
    %115 = vmatprep.subr.mxu0 0.0
    %116 = vmatpush1.msra.mxu0 0.0
    %117 = vmatprep.subr.mxu0 0.0
    %118 = vmatpush1.msra.mxu0 0.0
    %119 = vmatprep.subr.mxu0 0.0
    %120 = vmatpush1.msra.mxu0 0.0
    %121 = vmatprep.subr.mxu0 0.0
    %122 = vmatpush1.msra.mxu0 0.0
    %123 = vmatprep.subr.mxu0 0.0
    %124 = vmatpush1.msra.mxu0 0.0
    %125 = vmatprep.subr.mxu0 0.0
    %126 = vmatpush1.msra.mxu0 0.0
    %127 = vmatprep.subr.mxu0 0.0
    %128 = vmatpush1.msra.mxu0 0.0
    %129 = vmatprep.subr.mxu0 0.0
    %130 = vmatpush1.msra.mxu0 0.0
    %131 = vmatprep.subr.mxu0 0.0
    %132 = vmatpush1.msra.mxu0 0.0
    %133 = vmatprep.subr.mxu0 0.0
    %134 = vmatpush1.msra.mxu0 0.0
    %135 = vmatprep.subr.mxu0 0.0
    %136 = vmatpush1.msra.mxu0 0.0
    %137 = vmatprep.subr.mxu0 0.0
    %138 = vmatpush1.msra.mxu0 0.0
    %139 = vmatprep.subr.mxu0 0.0
    %140 = vmatpush1.msra.mxu0 0.0
    %141 = vmatprep.mubr.f32.mxu0 0.0
    %142 = vmatmul.mubr.f32.gmra.mrb[0].mxu0 %v75
    %v143 = vpop.f32.mrb[0].mxu0
    %v144 = vadd.f32 %v71, %v143
    %v145 = vpop.f32.mrb[0].mxu0
    %146 = vdwg.mxu0
    %147 = vst [vmem:[#allocation8] sm:$0xff] %v144
    // Predicated region
    $region26: #{tpu_custom_call.1} parent=1 // pred_check
      _
    $region27: #{tpu_custom_call.1} parent=1 // pred_check_branch
      %149 = sbr.rel (0) target = $region29
    $region28: #{tpu_custom_call.1} parent=1 // pred_region
      %s151 = ssub.s32 128, 128
      %152 = vsyncadd [#allocation4], %s151
      %s154 = sshll.u32 [#allocation8], 4
      %s155 = int_to_ptr.vmem [resolvable:$true] %s154
      %157 = dma.vmem_to_hbm [thread:$0]  %s155, 128, %s3, [#allocation4]
    $region29: #{tpu_custom_call.1} parent=1 // pred_fallthru
      _
    // Predicated region
    $region30: #{tpu_custom_call.1} parent=1 // pred_check
      _
    $region31: #{tpu_custom_call.1} parent=1 // pred_check_branch
      %159 = sbr.rel (0) target = $region33
    $region32: #{tpu_custom_call.1} parent=1 // pred_region
      %160 = dma.done [#allocation4], 128
    $region33: #{tpu_custom_call.1} parent=1 // pred_fallthru
      _
    %161 = vsyncpa [#allocation3], 1
    %162 = vsyncpa [#allocation6], 1
    %163 = vsyncpa [#allocation4], 1

</llo_original>
